<compile_context>
chip_gen: v7x
topology: tpu7x:2x2x1
jax: 0.10.0
libtpu: 0.0.40
codegen_flags: <defaults>
</compile_context>

<pallas_src>
import jax
import jax.numpy as jnp
from jax.experimental import pallas as pl
from jax.experimental.pallas import tpu as pltpu

# Folded constants:
#   v9 = v1*(3.2766008787968 + 0.2) + 0.2*v1*tanh(v1*(C1 + C2*v1^2))
_C1 = 10.188842994226304
_C2 = 10.188842994226304 * 6.8625
_CLIN = 3.2766008787968 + 0.2
_CTANH = 0.2

LANE = 128


def _round_up(x, m):
    return ((x + m - 1) // m) * m


def _fused_kernel(w_ref, b_ref, x_ref, o_ref):
    # w_ref: SMEM (3,) f32   -- conv_transpose weight (one scalar per in-channel)
    # b_ref: SMEM (1,) f32   -- bias of the single output channel
    # x_ref: VMEM (bt, 3, rt, 128) f32   [aligned path]  or (bt, 3, tl) f32 [ragged path]
    # o_ref: VMEM (bt, rt, 128) f32                      or (bt, tl) f32
    w0 = w_ref[0]
    w1 = w_ref[1]
    w2 = w_ref[2]
    bias = b_ref[0]

    # Per-channel reads straight from the ref: three clean load streams, no
    # large 4-D intermediate kept live across the epilogue.
    v1 = x_ref[:, 0] * w0 + x_ref[:, 1] * w1 + x_ref[:, 2] * w2 + bias

    # Elementwise epilogue with constants folded; tanh rides the EUP slot.
    t = jnp.tanh(v1 * (_C1 + _C2 * (v1 * v1)))
    o_ref[...] = v1 * (_CLIN + _CTANH * t)


def model_forward(x, weight, bias):
    """x: (B, 3, H, W); weight: (3,1,1,1) or (3,); bias: (1,) -> (B, 1, H, W) f32."""
    B, C, H, W = x.shape
    assert C == 3
    x = x.astype(jnp.float32)
    weight = jnp.asarray(weight, jnp.float32).reshape(-1)   # torch (3,1,1,1) -> (3,)
    bias = jnp.asarray(bias, jnp.float32).reshape(-1)       # (1,)
    HW = H * W

    # Generation-aware budgets: bigger tiles / scoped VMEM on 128 MiB chips.
    try:
        vmem_cap = int(getattr(pltpu.get_tpu_info(), "vmem_capacity_bytes"))
    except Exception:
        vmem_cap = 64 << 20                      # conservative (v7x-sized)
    big_vmem = vmem_cap >= (100 << 20)           # v5e / v6e
    rows_budget = 4096 if big_vmem else 2048     # (bt * row-tiles-of-128) per block
    max_rows = 2048 if big_vmem else 1024        # cap on the spatial row tile
    vmem_limit = (64 << 20) if big_vmem else (32 << 20)

    cparams = pltpu.CompilerParams(
        dimension_semantics=("parallel", "parallel"),
        vmem_limit_bytes=vmem_limit,
    )

    if HW % LANE == 0:
        # ---------- Lane-aligned fast path: free reshape to dense (R,128) planes.
        R = HW // LANE
        x4 = x.reshape(B, C, R, LANE)

        # Balanced spatial row tile (multiple of 8, or the full extent R).
        if R <= max_rows:
            rt = R
        else:
            rt = _round_up(pl.cdiv(R, pl.cdiv(R, max_rows)), 8)
        # Largest batch tile under the block budget, then balanced.
        bt = max(1, min(B, rows_budget // rt))
        bt = pl.cdiv(B, pl.cdiv(B, bt))
        # Guarantee >= 2 grid steps along a parallel axis (v7x has 2 TensorCores).
        if pl.cdiv(B, bt) == 1 and pl.cdiv(R, rt) == 1:
            if B >= 2:
                bt = pl.cdiv(B, 2)
            elif R >= 16:
                rt = _round_up(pl.cdiv(R, 2), 8)
        grid = (pl.cdiv(B, bt), pl.cdiv(R, rt))

        out = pl.pallas_call(
            _fused_kernel,
            out_shape=jax.ShapeDtypeStruct((B, R, LANE), jnp.float32),
            grid_spec=pltpu.PrefetchScalarGridSpec(
                num_scalar_prefetch=0,
                grid=grid,
                in_specs=[
                    pl.BlockSpec(memory_space=pltpu.MemorySpace.SMEM),   # weight (3,)
                    pl.BlockSpec(memory_space=pltpu.MemorySpace.SMEM),   # bias (1,)
                    pl.BlockSpec((bt, C, rt, LANE), lambda b, r: (b, 0, r, 0)),
                ],
                out_specs=pl.BlockSpec((bt, rt, LANE), lambda b, r: (b, r, 0)),
            ),
            compiler_params=cparams,
        )(weight, bias, x4)
        return out.reshape(B, 1, H, W)

    # ---------- Ragged path (HW % 128 != 0): no pad / slice HBM round trips.
    # x stays flat as (B, C, HW); the trailing spatial tile is ragged and Pallas
    # masks OOB stores. No cross-lane ops are performed, so undefined OOB input
    # lanes are harmless.
    x3 = x.reshape(B, C, HW)
    n_lb = pl.cdiv(HW, LANE)                       # number of 128-lane groups
    if n_lb <= max_rows:
        tl = HW                                    # full-extent block dim (legal)
    else:
        tl = pl.cdiv(n_lb, pl.cdiv(n_lb, max_rows)) * LANE
    tl_rows = pl.cdiv(tl, LANE)
    bt_max = max(1, rows_budget // tl_rows)
    if B <= bt_max:
        bt = B                                     # block dim == full dim: legal
    else:
        bt = max(8, (bt_max // 8) * 8)             # output 2nd-minor dim: mult of 8
    nb, nt = pl.cdiv(B, bt), pl.cdiv(HW, tl)
    # >= 2 grid steps for v7x's two TensorCores when cheaply possible.
    if nb == 1 and nt == 1:
        if n_lb >= 2:
            tl = pl.cdiv(n_lb, 2) * LANE
        elif B >= 16:
            bt = _round_up(pl.cdiv(B, 2), 8)
        nb, nt = pl.cdiv(B, bt), pl.cdiv(HW, tl)
    grid = (nb, nt)

    out = pl.pallas_call(
        _fused_kernel,
        out_shape=jax.ShapeDtypeStruct((B, HW), jnp.float32),
        grid_spec=pltpu.PrefetchScalarGridSpec(
            num_scalar_prefetch=0,
            grid=grid,
            in_specs=[
                pl.BlockSpec(memory_space=pltpu.MemorySpace.SMEM),       # weight (3,)
                pl.BlockSpec(memory_space=pltpu.MemorySpace.SMEM),       # bias (1,)
                pl.BlockSpec((bt, C, tl), lambda b, t: (b, 0, t)),
            ],
            out_specs=pl.BlockSpec((bt, tl), lambda b, t: (b, t)),
        ),
        compiler_params=cparams,
    )(weight, bias, x3)
    return out.reshape(B, 1, H, W)


def _reference(x, weight, bias):
    # Exact unfused chain from the PyTorch module (stride treated as 1).
    w = jnp.asarray(weight, jnp.float32).reshape(-1)
    b = jnp.asarray(bias, jnp.float32).reshape(-1)
    v1 = jnp.einsum("bchw,c->bhw", x.astype(jnp.float32), w)[:, None]
    v1 = v1 + b[None, :, None, None]
    v10 = v1 * 0.2
    v11 = v1 * v1 * v1
    v12 = v11 * 6.8625
    v13 = v1 + v12
    v14 = v13 * 10.188842994226304
    v15 = jnp.tanh(v14)
    v16 = v15 + 1.0
    v17 = v1 * 3.2766008787968
    return v17 + v10 * v16


if __name__ == "__main__":
    key = jax.random.PRNGKey(0)
    kx, kw, kb, kx2 = jax.random.split(key, 4)

    # Small shapes consistent with the module (in_channels fixed at 3 by the conv).
    B, C, H, W = 2, 3, 16, 16
    x = jax.random.normal(kx, (B, C, H, W), dtype=jnp.float32)

    # ConvTranspose2d(3, 1, 1) parameters in torch layout: weight (3,1,1,1), bias (1,)
    bound = 1.0 / jnp.sqrt(3.0)
    weight = jax.random.uniform(kw, (3, 1, 1, 1), jnp.float32, -bound, bound)
    bias = jax.random.uniform(kb, (1,), jnp.float32, -bound, bound)

    # Lane-aligned path (H*W % 128 == 0).
    y = model_forward(x, weight, bias)
    jax.block_until_ready(y)
    assert y.shape == (B, 1, H, W)
    assert jnp.allclose(y, _reference(x, weight, bias), atol=1e-5, rtol=1e-5)

    # Ragged-spatial path (H*W % 128 != 0) — exercises the no-pad/no-slice path.
    x_r = jax.random.normal(kx2, (2, 3, 10, 10), dtype=jnp.float32)
    y_r = model_forward(x_r, weight, bias)
    jax.block_until_ready(y_r)
    assert y_r.shape == (2, 1, 10, 10)
    assert jnp.allclose(y_r, _reference(x_r, weight, bias), atol=1e-5, rtol=1e-5)

    print("KERNEL_OK")
</pallas_src>

<mosaic_0001>
module attributes {stable_mosaic.version = 11 : i64} {
  func.func @_fused_kernel(%arg0: i32, %arg1: i32, %arg2: memref<3xf32, #tpu.memory_space<smem>>, %arg3: memref<1xf32, #tpu.memory_space<smem>>, %arg4: memref<1x3x2x128xf32, #tpu.memory_space<vmem>>, %arg5: memref<1x2x128xf32, #tpu.memory_space<vmem>>) attributes {dimension_semantics = [#tpu.dimension_semantics<parallel>, #tpu.dimension_semantics<parallel>], iteration_bounds = array<i64: 2, 1>, scalar_prefetch = 0 : i64, scratch_operands = 0 : i64, tpu.core_type = #tpu.core_type<tc>, window_params = [{transform_indices = @transform_0, window_bounds = array<i64: 3>}, {transform_indices = @transform_1, window_bounds = array<i64: 1>}, {transform_indices = @transform_2, window_bounds = array<i64: 1, 3, 2, 128>}, {transform_indices = @transform_3, window_bounds = array<i64: 1, 2, 128>}]} {
    %c0 = arith.constant 0 : index
    %0 = memref.load %arg2[%c0] : memref<3xf32, #tpu.memory_space<smem>>
    %c1 = arith.constant 1 : index
    %1 = memref.load %arg2[%c1] : memref<3xf32, #tpu.memory_space<smem>>
    %c2 = arith.constant 2 : index
    %2 = memref.load %arg2[%c2] : memref<3xf32, #tpu.memory_space<smem>>
    %c0_0 = arith.constant 0 : index
    %3 = memref.load %arg3[%c0_0] : memref<1xf32, #tpu.memory_space<smem>>
    %c0_1 = arith.constant 0 : index
    %c0_2 = arith.constant 0 : index
    %c0_3 = arith.constant 0 : index
    %c0_4 = arith.constant 0 : index
    %4 = vector.load %arg4[%c0_1, %c0_2, %c0_3, %c0_4] : memref<1x3x2x128xf32, #tpu.memory_space<vmem>>, vector<1x1x2x128xf32>
    %5 = vector.shape_cast %4 : vector<1x1x2x128xf32> to vector<1x2x128xf32>
    %6 = vector.broadcast %0 : f32 to vector<1x2x128xf32>
    %7 = arith.mulf %5, %6 : vector<1x2x128xf32>
    %c0_5 = arith.constant 0 : index
    %c1_6 = arith.constant 1 : index
    %c0_7 = arith.constant 0 : index
    %c0_8 = arith.constant 0 : index
    %8 = vector.load %arg4[%c0_5, %c1_6, %c0_7, %c0_8] : memref<1x3x2x128xf32, #tpu.memory_space<vmem>>, vector<1x1x2x128xf32>
    %9 = vector.shape_cast %8 : vector<1x1x2x128xf32> to vector<1x2x128xf32>
    %10 = vector.broadcast %1 : f32 to vector<1x2x128xf32>
    %11 = arith.mulf %9, %10 : vector<1x2x128xf32>
    %12 = arith.addf %7, %11 : vector<1x2x128xf32>
    %c0_9 = arith.constant 0 : index
    %c2_10 = arith.constant 2 : index
    %c0_11 = arith.constant 0 : index
    %c0_12 = arith.constant 0 : index
    %13 = vector.load %arg4[%c0_9, %c2_10, %c0_11, %c0_12] : memref<1x3x2x128xf32, #tpu.memory_space<vmem>>, vector<1x1x2x128xf32>
    %14 = vector.shape_cast %13 : vector<1x1x2x128xf32> to vector<1x2x128xf32>
    %15 = vector.broadcast %2 : f32 to vector<1x2x128xf32>
    %16 = arith.mulf %14, %15 : vector<1x2x128xf32>
    %17 = arith.addf %12, %16 : vector<1x2x128xf32>
    %18 = vector.broadcast %3 : f32 to vector<1x2x128xf32>
    %19 = arith.addf %17, %18 : vector<1x2x128xf32>
    %20 = arith.mulf %19, %19 : vector<1x2x128xf32>
    %cst = arith.constant 69.9209366 : f32
    %21 = vector.broadcast %cst : f32 to vector<1x2x128xf32>
    %22 = arith.mulf %21, %20 : vector<1x2x128xf32>
    %cst_13 = arith.constant 10.1888428 : f32
    %23 = vector.broadcast %cst_13 : f32 to vector<1x2x128xf32>
    %24 = arith.addf %23, %22 : vector<1x2x128xf32>
    %25 = arith.mulf %19, %24 : vector<1x2x128xf32>
    %26 = math.tanh %25 : vector<1x2x128xf32>
    %cst_14 = arith.constant 2.000000e-01 : f32
    %27 = vector.broadcast %cst_14 : f32 to vector<1x2x128xf32>
    %28 = arith.mulf %27, %26 : vector<1x2x128xf32>
    %cst_15 = arith.constant 3.47660089 : f32
    %29 = vector.broadcast %cst_15 : f32 to vector<1x2x128xf32>
    %30 = arith.addf %29, %28 : vector<1x2x128xf32>
    %31 = arith.mulf %19, %30 : vector<1x2x128xf32>
    %c0_16 = arith.constant 0 : index
    %c0_17 = arith.constant 0 : index
    %c0_18 = arith.constant 0 : index
    %32 = vector.load %arg5[%c0_16, %c0_17, %c0_18] : memref<1x2x128xf32, #tpu.memory_space<vmem>>, vector<1x2x128xf32>
    tpu.vector_store %arg5[%c0_16, %c0_17, %c0_18], %31 {strides = array<i32>} : memref<1x2x128xf32, #tpu.memory_space<vmem>>, vector<1x2x128xf32>,
    return
  }
  func.func @transform_0(%arg0: i32, %arg1: i32) -> i32 {
    %c0_i32 = arith.constant 0 : i32
    %c0_i32_0 = arith.constant 0 : i32
    return %c0_i32 : i32
  }
  func.func @transform_1(%arg0: i32, %arg1: i32) -> i32 {
    %c0_i32 = arith.constant 0 : i32
    %c0_i32_0 = arith.constant 0 : i32
    return %c0_i32 : i32
  }
  func.func @transform_2(%arg0: i32, %arg1: i32) -> (i32, i32, i32, i32) {
    %c0_i32 = arith.constant 0 : i32
    %c0_i32_0 = arith.constant 0 : i32
    %c0_i32_1 = arith.constant 0 : i32
    return %arg0, %c0_i32, %arg1, %c0_i32_0 : i32, i32, i32, i32
  }
  func.func @transform_3(%arg0: i32, %arg1: i32) -> (i32, i32, i32) {
    %c0_i32 = arith.constant 0 : i32
    %c0_i32_0 = arith.constant 0 : i32
    return %arg0, %arg1, %c0_i32 : i32, i32, i32
  }
}

</mosaic_0001>

<llo_original>
// kernel: tpu_custom_call.1
$region0: #{tpu_custom_call.1}
  #allocation0 [shape = 'u32[]', space=smem, size = 0x4, offset = 0x4, fixed_abs, tag = 'smem constant byte address 0x4 - core index']
  #allocation1 [shape = 'u32[144,128]{1,0:T(1,128)}', space=vmem, size = 0x12000, scoped, tag = 'internal scratch']
  #allocation2 [shape = 'f32[1]{0:T(128)S(6)}', space=smem, size = 0x200, scoped, tag = 'scoped memory for tpu_custom_call.1']
  %s0 = inlined_call_operand.vmem [shape: f32[3], index: 0, kind: input, shape index: {}]
  %s1 = inlined_call_operand.<no memory space> [shape: f32[1], index: 1, kind: input, shape index: {}]
  %s2 = inlined_call_operand.hbm [shape: f32[2,3,2,128], index: 2, kind: input, shape index: {}]
  %s3 = inlined_call_operand.hbm [shape: f32[2,2,128], index: 3, kind: output, shape index: {}]
  %s4 = sld [smem:[#allocation0]]
  $region53: #{tpu_custom_call.1} parent=0
    _
  %s6 = ssub.s32 1, %s4
  %s7 = scalar_select 0, %s6, %s4
  %8 = sst [smem:[#allocation2]] %s1
  $region1: #{tpu_custom_call.1} parent=0
    #allocation3 [shape = 'u8[512]{0}', space=smem, size = 0x200, scoped, tag = 'input window, operand 0, single buffered']
    #allocation4 [shape = 's32[2]{0}', space=sflag, size = 0x8, scoped, tag = 'scoped memory for tpu_custom_call.1']
    #allocation5 [shape = 's32[2]{0}', space=sflag, size = 0x8, scoped, tag = 'scoped memory for tpu_custom_call.1']
    #allocation6 [shape = 's32[2]{0}', space=sflag, size = 0x8, scoped, tag = 'scoped memory for tpu_custom_call.1']
    #allocation7 [shape = 'u8[6144]{0}', space=vmem, size = 0x1800, scoped, tag = 'input window, operand 2']
    #allocation8 [shape = 'u8[2048]{0}', space=vmem, size = 0x800, scoped, tag = 'output window, operand 0']
    %9 = vsyncpa [#allocation6], 0
    %10 = vsyncpa [#allocation4], 0
    %s11 = scalar_lea.sflag [#allocation4], 1
    %12 = vsyncpa %s11, 0
    %13 = vsyncpa [#allocation5], 0
    %s14 = scalar_lea.sflag [#allocation5], 1
    %15 = vsyncpa %s14, 0
    loop: start=0, step=1, limit=4
    $region2: #{tpu_custom_call.1} parent=1 // loop_pre_header
      _
    $region3: #{tpu_custom_call.1} parent=1 // loop_header
      %s17 = sphi 0, %s21
      %p18 = scmp.ge.s32.totalorder %s17, 4
      %s24 = sphi 0, %s36
      %s25 = sphi 0, %s32
      %s26 = sphi 0, %s24
      %s27 = sphi 0, %s25
      %s28 = sphi 0, %s26
      %s29 = sphi 0, %s27
      %s37 = sphi 0, %s37
      %s39 = sphi 0, %s37
      %s40 = sphi 0, %s39
      %s54 = sphi 0, %s40
      %s58 = sphi 0, %s58
      %s60 = sphi 0, %s58
      %s61 = sphi 0, %s60
      %s75 = sphi 0, %s61
      %s83 = sphi 0, %s85
      %s86 = sphi 0, %s83
      %s87 = sphi 0, %s86
      %s103 = sphi 0, %s87
      %s111 = sphi 0, %s113
      %s114 = sphi 0, %s111
      %s115 = sphi 0, %s114
      %s131 = sphi 0, %s115
    $region4: #{tpu_custom_call.1} parent=1 // loop_header_branch
      %20 = sbr.rel (%p18) target = $region8
    $region5: #{tpu_custom_call.1} parent=1 // loop_body
      %s22 = ssub.s32 %s17, 1
      %s23 = ssub.s32 %s17, 2
      %s30 = sadd.s32 1, %s25
      %p31 = scmp.ge.s32.totalorder %s30, 1
      %s32 = scalar_select %p31, 0, %s30
      %s33 = sadd.s32 1, %s24
      %s34 = scalar_select %p31, %s33, %s24
      %p35 = scmp.ge.s32.totalorder %s34, 2
      %s36 = scalar_select %p35, 0, %s34
      %s38 = sadd.s32 %s37, 1
      %p41 = scmp.eq.s32.totalorder %s17, 1
      %p42 = scmp.ne.s32.totalorder %s37, %s39
      %p43 = scmp.eq.s32.totalorder %s17, 0
      %p44 = por %p42, %p43
      %p45 = scmp.ne.s32.totalorder %s37, %s39
      %p46 = scmp.eq.s32.totalorder %s22, 1
      %p47 = por %p45, %p46
      %p48 = scmp.ne.s32.totalorder %s39, %s40
      %p49 = scmp.eq.s32.totalorder %s22, 0
      %p50 = por %p48, %p49
      %p51 = scmp.ne.s32.totalorder %s39, %s40
      %p52 = scmp.eq.s32.totalorder %s23, 1
      %p53 = por %p51, %p52
      %p55 = scmp.ne.s32.totalorder %s40, %s54
      %p56 = scmp.eq.s32.totalorder %s23, 0
      %p57 = por %p55, %p56
      %s59 = sadd.s32 %s58, 1
      %p62 = scmp.eq.s32.totalorder %s17, 1
      %p63 = scmp.ne.s32.totalorder %s58, %s60
      %p64 = scmp.eq.s32.totalorder %s17, 0
      %p65 = por %p63, %p64
      %p66 = scmp.ne.s32.totalorder %s58, %s60
      %p67 = scmp.eq.s32.totalorder %s22, 1
      %p68 = por %p66, %p67
      %p69 = scmp.ne.s32.totalorder %s60, %s61
      %p70 = scmp.eq.s32.totalorder %s22, 0
      %p71 = por %p69, %p70
      %p72 = scmp.ne.s32.totalorder %s60, %s61
      %p73 = scmp.eq.s32.totalorder %s23, 1
      %p74 = por %p72, %p73
      %p76 = scmp.ne.s32.totalorder %s61, %s75
      %p77 = scmp.eq.s32.totalorder %s23, 0
      %p78 = por %p76, %p77
      %s79 = ssub.s32 %s24, %s36
      %s80 = ssub.s32 %s25, %s32
      %s81 = sor.u32 %s79, %s80
      %p82 = scmp.eq.s32.totalorder %s81, 0
      %s84 = sadd.s32 %s83, 1
      %s85 = scalar_select %p82, %s83, %s84
      %p88 = pneg %p82
      %p89 = scmp.eq.s32.totalorder %s17, 1
      %p90 = por %p88, %p89
      %p91 = scmp.ne.s32.totalorder %s83, %s86
      %p92 = scmp.eq.s32.totalorder %s17, 0
      %p93 = por %p91, %p92
      %p94 = scmp.ne.s32.totalorder %s83, %s86
      %p95 = scmp.eq.s32.totalorder %s22, 1
      %p96 = por %p94, %p95
      %p97 = scmp.ne.s32.totalorder %s86, %s87
      %p98 = scmp.eq.s32.totalorder %s22, 0
      %p99 = por %p97, %p98
      %p100 = scmp.ne.s32.totalorder %s86, %s87
      %p101 = scmp.eq.s32.totalorder %s23, 1
      %p102 = por %p100, %p101
      %p104 = scmp.ne.s32.totalorder %s87, %s103
      %p105 = scmp.eq.s32.totalorder %s23, 0
      %p106 = por %p104, %p105
      %s107 = ssub.s32 %s24, %s36
      %s108 = ssub.s32 %s25, %s32
      %s109 = sor.u32 %s107, %s108
      %p110 = scmp.eq.s32.totalorder %s109, 0
      %s112 = sadd.s32 %s111, 1
      %s113 = scalar_select %p110, %s111, %s112
      %p116 = pneg %p110
      %p117 = scmp.eq.s32.totalorder %s17, 1
      %p118 = por %p116, %p117
      %p119 = scmp.ne.s32.totalorder %s111, %s114
      %p120 = scmp.eq.s32.totalorder %s17, 0
      %p121 = por %p119, %p120
      %p122 = scmp.ne.s32.totalorder %s111, %s114
      %p123 = scmp.eq.s32.totalorder %s22, 1
      %p124 = por %p122, %p123
      %p125 = scmp.ne.s32.totalorder %s114, %s115
      %p126 = scmp.eq.s32.totalorder %s22, 0
      %p127 = por %p125, %p126
      %p128 = scmp.ne.s32.totalorder %s114, %s115
      %p129 = scmp.eq.s32.totalorder %s23, 1
      %p130 = por %p128, %p129
      %p132 = scmp.ne.s32.totalorder %s115, %s131
      %p133 = scmp.eq.s32.totalorder %s23, 0
      %p134 = por %p132, %p133
      %p135 = scmp.le.s32.totalorder 1, %s17
      %p136 = scmp.lt.s32.totalorder %s17, 3
      %p137 = pnand %p135, %p136
      %p138 = pneg %p137
      // Predicated region
      $region9: #{tpu_custom_call.1} parent=5 // pred_check
        _
      $region10: #{tpu_custom_call.1} parent=5 // pred_check_branch
        %140 = sbr.rel (%p137) target = $region12
      $region11: #{tpu_custom_call.1} parent=5 // pred_region
        %s141 = ssub.s32 %s17, 1
        // Predicated region
        $region13: #{tpu_custom_call.1} parent=11 // pred_check
          %p142 = pneg %p50
        $region14: #{tpu_custom_call.1} parent=11 // pred_check_branch
          %144 = sbr.rel (%p142) target = $region16
        $region15: #{tpu_custom_call.1} parent=11 // pred_region
          %s146 = ssub.s32 16, 16
          %147 = vsyncadd [#allocation6], %s146
          %s149 = sshll.u32 %s0, 4
          %s150 = int_to_ptr.vmem [resolvable:$true] %s149
          %152 = dma.vmem_to_smem %s150, 16, [#allocation3], [#allocation6]
        $region16: #{tpu_custom_call.1} parent=11 // pred_fallthru
          _
        // Predicated region
        $region17: #{tpu_custom_call.1} parent=11 // pred_check
          %p153 = pneg %p71
        $region18: #{tpu_custom_call.1} parent=11 // pred_check_branch
          %155 = sbr.rel (%p153) target = $region20
        $region19: #{tpu_custom_call.1} parent=11 // pred_region
          _
        $region20: #{tpu_custom_call.1} parent=11 // pred_fallthru
          _
      $region12: #{tpu_custom_call.1} parent=5 // pred_fallthru
        _
      %p156 = scmp.lt.s32.totalorder %s17, 2
      // Predicated region
      $region21: #{tpu_custom_call.1} parent=5 // pred_check
        %p157 = pneg %p156
      $region22: #{tpu_custom_call.1} parent=5 // pred_check_branch
        %159 = sbr.rel (%p157) target = $region24
      $region23: #{tpu_custom_call.1} parent=5 // pred_region
        // Predicated region
        $region25: #{tpu_custom_call.1} parent=23 // pred_check
          %p160 = pneg %p93
        $region26: #{tpu_custom_call.1} parent=23 // pred_check_branch
          %162 = sbr.rel (%p160) target = $region28
        $region27: #{tpu_custom_call.1} parent=23 // pred_region
          %s163 = sand.u32 %s83, 1
          %s164 = scalar_lea.sflag [#allocation4], %s163
          %s165 = sand.u32 %s83, 1
          %s166 = smul.addr %s165, 6
          %s167 = scalar_lea.vmem [#allocation7], %s166
          %s169 = ssub.s32 96, 96
          %170 = vsyncadd %s164, %s169
          %s171 = smul.addr %s24, 3
          %s172 = sadd.s32 %s25, %s171
          %s173 = smul.addr %s172, 32
          %s174 = scalar_lea.hbm %s2, %s173
          %s175 = sshll.u32 %s167, 4
          %s176 = int_to_ptr.vmem [resolvable:$true] %s175
          %181 = dma.hbm_to_vmem [thread:$0]  %s174, 96, %s176, %s164, 32, 32, 2
        $region28: #{tpu_custom_call.1} parent=23 // pred_fallthru
          _
      $region24: #{tpu_custom_call.1} parent=5 // pred_fallthru
        _
      %p182 = scmp.le.s32.totalorder 1, %s17
      %p183 = scmp.lt.s32.totalorder %s17, 3
      %p184 = pnand %p182, %p183
      %p185 = pneg %p184
      // Predicated region
      $region29: #{tpu_custom_call.1} parent=5 // pred_check
        _
      $region30: #{tpu_custom_call.1} parent=5 // pred_check_branch
        %187 = sbr.rel (%p184) target = $region32
      $region31: #{tpu_custom_call.1} parent=5 // pred_region
        %s188 = ssub.s32 %s17, 1
        // Predicated region
        $region33: #{tpu_custom_call.1} parent=31 // pred_check
          %p189 = pneg %p50
        $region34: #{tpu_custom_call.1} parent=31 // pred_check_branch
          %191 = sbr.rel (%p189) target = $region36
        $region35: #{tpu_custom_call.1} parent=31 // pred_region
          %192 = dma.done [#allocation6], 16
        $region36: #{tpu_custom_call.1} parent=31 // pred_fallthru
          _
        %s193 = sand.u32 %s86, 1
        %s194 = scalar_lea.sflag [#allocation4], %s193
        %s195 = sand.u32 %s86, 1
        %s196 = smul.addr %s195, 6
        %s197 = scalar_lea.vmem [#allocation7], %s196
        // Predicated region
        $region37: #{tpu_custom_call.1} parent=31 // pred_check
          %p198 = pneg %p99
        $region38: #{tpu_custom_call.1} parent=31 // pred_check_branch
          %200 = sbr.rel (%p198) target = $region40
        $region39: #{tpu_custom_call.1} parent=31 // pred_region
          %201 = dma.done %s194, 96
        $region40: #{tpu_custom_call.1} parent=31 // pred_fallthru
          _
        %202 = sfence
        %p203 = pneg %p50
        %p204 = pneg %p47
        %p205 = pneg %p71
        %p206 = pneg %p68
        %s207 = sand.u32 %s86, 1
        %s208 = scalar_lea.sflag [#allocation4], %s207
        %s209 = sand.u32 %s86, 1
        %s210 = smul.addr %s209, 6
        %s211 = scalar_lea.vmem [#allocation7], %s210
        %p212 = pneg %p99
        %p213 = pneg %p96
        %p214 = pneg %p127
        %p215 = pneg %p124
        %s216 = sand.u32 %s114, 1
        %s217 = scalar_lea.sflag [#allocation5], %s216
        %s218 = sand.u32 %s114, 1
        %s219 = smul.addr %s218, 2
        %s220 = scalar_lea.vmem [#allocation8], %s219
        %s221 = sld [smem:[#allocation3]]
        %s222 = sld [smem:[#allocation3 + $0x1]]
        %s223 = sld [smem:[#allocation3 + $0x2]]
        %s224 = sld [smem:[#allocation2]]
        %v225 = vld [vmem:[%s197] sm:$0x3]
        %v226 = vstv %s221
        %v227 = vmul.f32 %v225, %v226
        %s228 = scalar_lea.vmem %s197, 2 [#allocation7]
        %v229 = vld [vmem:[%s228] sm:$0x3]
        %v230 = vstv %s222
        %v231 = vmul.f32 %v229, %v230
        %v232 = vadd.f32 %v227, %v231
        %s233 = scalar_lea.vmem %s197, 4 [#allocation7]
        %v234 = vld [vmem:[%s233] sm:$0x3]
        %v235 = vstv %s223
        %v236 = vmul.f32 %v234, %v235
        %v237 = vadd.f32 %v232, %v236
        %v238 = vstv %s224
        %v239 = vadd.f32 %v237, %v238
        %v240 = vmul.f32 %v239, %v239
        %v241 = vmul.f32 %v240, 69.92094
        %v242 = vadd.f32 %v241, 10.188843
        %v243 = vmul.f32 %v239, %v242
        %v244 = vtanh.pop %v243
        %v245 = vmul.f32 %v244, 0.2
        %v246 = vadd.f32 %v245, 3.476601
        %v247 = vmul.f32 %v239, %v246
        %248 = vst [vmem:[%s220] sm:$0x3] %v247
        %s249 = sand.u32 %s114, 1
        %s250 = scalar_lea.sflag [#allocation5], %s249
        %s251 = sand.u32 %s114, 1
        %s252 = smul.addr %s251, 2
        %s253 = scalar_lea.vmem [#allocation8], %s252
        // Predicated region
        $region41: #{tpu_custom_call.1} parent=31 // pred_check
          %p254 = pneg %p124
        $region42: #{tpu_custom_call.1} parent=31 // pred_check_branch
          %256 = sbr.rel (%p254) target = $region44
        $region43: #{tpu_custom_call.1} parent=31 // pred_region
          %s258 = ssub.s32 32, 32
          %259 = vsyncadd %s250, %s258
          %s260 = sadd.s32 %s27, %s26
          %s261 = smul.addr %s260, 32
          %s262 = scalar_lea.hbm %s3, %s261
          %s264 = sshll.u32 %s253, 4
          %s265 = int_to_ptr.vmem [resolvable:$true] %s264
          %267 = dma.vmem_to_hbm [thread:$0]  %s265, 32, %s262, %s250
        $region44: #{tpu_custom_call.1} parent=31 // pred_fallthru
          _
      $region32: #{tpu_custom_call.1} parent=5 // pred_fallthru
        _
      %p268 = scmp.le.s32.totalorder 2, %s17
      // Predicated region
      $region45: #{tpu_custom_call.1} parent=5 // pred_check
        %p269 = pneg %p268
      $region46: #{tpu_custom_call.1} parent=5 // pred_check_branch
        %271 = sbr.rel (%p269) target = $region48
      $region47: #{tpu_custom_call.1} parent=5 // pred_region
        %s272 = ssub.s32 %s17, 2
        // Predicated region
        $region49: #{tpu_custom_call.1} parent=47 // pred_check
          %p273 = pneg %p130
        $region50: #{tpu_custom_call.1} parent=47 // pred_check_branch
          %275 = sbr.rel (%p273) target = $region52
        $region51: #{tpu_custom_call.1} parent=47 // pred_region
          %s276 = sand.u32 %s115, 1
          %s277 = scalar_lea.sflag [#allocation5], %s276
          %s278 = sand.u32 %s115, 1
          %s279 = smul.addr %s278, 2
          %s280 = scalar_lea.vmem [#allocation8], %s279
          %281 = dma.done %s277, 32
        $region52: #{tpu_custom_call.1} parent=47 // pred_fallthru
          _
      $region48: #{tpu_custom_call.1} parent=5 // pred_fallthru
        _
    $region6: #{tpu_custom_call.1} parent=1 // loop_footer
      %s21 = sadd.s32 1, %s17
    $region7: #{tpu_custom_call.1} parent=1 // loop_footer_branch
      %16 = sbr.rel target = $region3
    $region8: #{tpu_custom_call.1} parent=1 // loop_exit
      _
    %282 = vsyncpa [#allocation4], 1
    %s283 = scalar_lea.sflag [#allocation4], 1
    %284 = vsyncpa %s283, 1
    %285 = vsyncpa [#allocation5], 1
    %s286 = scalar_lea.sflag [#allocation5], 1
    %287 = vsyncpa %s286, 1
    %288 = vsyncpa [#allocation6], 1
    %s289 = scalar_lea.sflag [#allocation6], 1
    %290 = vsyncpa %s289, 1

</llo_original>
